<compile_context>
chip_gen: v5e
topology: v5e:2x2
jax: 0.10.0
libtpu: 0.0.40
codegen_flags: <defaults>
</compile_context>

<pallas_src>
import functools

import jax
import jax.numpy as jnp
from jax.experimental import pallas as pl
from jax.experimental.pallas import tpu as pltpu


def _vmem_capacity_bytes():
    """Physical VMEM per core; conservative (v7x) fallback if the query fails."""
    try:
        info = pltpu.get_tpu_info()
        for name in ("vmem_capacity_bytes", "vmem_bytes", "vmem_size_bytes"):
            v = getattr(info, name, None)
            if v:
                return int(v)
    except Exception:
        pass
    return 64 * 1024 * 1024


# ----------------------------------------------------------------------------
# Kernel 1: tiled two-matmul (fc1 -> dropout(identity) -> fc2), sigmoid+bias in
# the wrapper epilogue.
# ----------------------------------------------------------------------------
def _reward_fused_kernel(h_ref, t_ref, w1_ref, w2_ref, o_ref, acc_ref, *, hidden_size):
    j = pl.program_id(1)

    @pl.when(j == 0)
    def _():
        acc_ref[...] = jnp.zeros_like(acc_ref)

    # fc1 column tile on the MXU, computed directly from the two concat halves
    # of x (no HBM-materialized concatenate):  x @ w1 = h @ w1[:H] + t @ w1[H:].
    ht = jnp.dot(h_ref[...], w1_ref[:hidden_size, :],
                 preferred_element_type=jnp.float32)
    ht = ht + jnp.dot(t_ref[...], w1_ref[hidden_size:, :],
                      preferred_element_type=jnp.float32)

    # fc2 partial contraction on the VPU/XLU in f32 (avoids an N=1 MXU matmul).
    # TODO(synk): training-mode dropout would have to be applied to ht here
    # (pltpu.prng_seed + random bits) and disables the bias fold / folded path.
    acc_ref[...] += jnp.sum(ht * w2_ref[...], axis=-1, keepdims=True)

    @pl.when(j == pl.num_programs(1) - 1)
    def _():
        o_ref[0] = acc_ref[...]


def reward_model_forward(hidden_state, token_embedding, params, *, block_n=None):
    """Tiled two-matmul forward.  hidden_state:(B,H), token_embedding:(B,T) -> (B,1)."""
    w1, b1, w2, b2 = params
    B, H = hidden_state.shape
    _, T = token_embedding.shape
    D = H + T
    assert w1.shape == (D, D), w1.shape

    hi = jax.lax.Precision.HIGHEST
    # Fold fc1's bias through fc2 once on the wrapper side (valid while dropout
    # is identity): a single scalar instead of a streamed b1 input.
    bias = (jnp.dot(jnp.reshape(b1, (1, D)), jnp.reshape(w2, (D, 1)), precision=hi)
            + jnp.reshape(b2, (1, 1))).astype(jnp.float32)            # (1, 1)

    # bf16 storage for streamed/resident arrays (halves HBM traffic); all
    # accumulation stays f32 (v5e has no bf16 VPU path anyway).
    h_bf = hidden_state.astype(jnp.bfloat16)
    t_bf = token_embedding.astype(jnp.bfloat16)
    w1_bf = w1.astype(jnp.bfloat16)
    w2_row = jnp.reshape(w2, (1, D)).astype(jnp.float32)

    # ---- tile sizing / VMEM budget (per generation) -------------------------
    vmem_cap = _vmem_capacity_bytes()
    budget = int(vmem_cap * 0.70)          # headroom for compiler scratch
    if block_n is None:
        if D % 128 != 0:
            block_n = D                    # full-extent block satisfies lane rule
        else:
            per_col = 2 * (D * 2)          # double-buffered bf16 w1 column bytes
            block_n = (int(budget * 0.6) // per_col) // 128 * 128
            block_n = max(128, min(D, block_n))
    block_n = min(block_n, D)
    if D % block_n != 0:
        block_n = D
    if block_n != D:
        assert block_n % 128 == 0 and D % block_n == 0

    n_steps = D // block_n
    n_outer = 2 if (n_steps >= 2 and n_steps % 2 == 0) else 1
    n_inner = n_steps // n_outer

    w1_tile_bytes = D * block_n * 2
    use_buffered = (n_inner >= 4) and (3 * w1_tile_bytes <= int(budget * 0.8))
    buf_count = 3 if use_buffered else 2

    footprint = (buf_count * w1_tile_bytes      # streamed w1 tiles
                 + 2 * block_n * 4              # streamed w2 row tiles
                 + 2 * B * D * 2                # resident h, t (with slack)
                 + 64 * B)                      # acc + output slack
    vmem_limit = min(int(vmem_cap * 0.9), max(2 * footprint, 32 * 1024 * 1024))

    w1_map = lambda c, j: (0, c * n_inner + j)
    if use_buffered:
        w1_spec = pl.BlockSpec((D, block_n), w1_map, pipeline_mode=pl.Buffered(3))
    else:
        w1_spec = pl.BlockSpec((D, block_n), w1_map)

    cost = pl.CostEstimate(
        flops=2 * B * D * D + 2 * B * D,
        transcendentals=0,
        bytes_accessed=2 * B * D + 2 * D * D + 4 * D + 4 * B * n_outer,
    )

    partials = pl.pallas_call(
        functools.partial(_reward_fused_kernel, hidden_size=H),
        out_shape=jax.ShapeDtypeStruct((n_outer, B, 1), jnp.float32),
        grid=(n_outer, n_inner),
        in_specs=[
            pl.BlockSpec((B, H), lambda c, j: (0, 0)),              # hidden: resident
            pl.BlockSpec((B, T), lambda c, j: (0, 0)),              # token: resident
            w1_spec,                                                # w1: streamed cols
            pl.BlockSpec((1, block_n), lambda c, j: (0, c * n_inner + j)),  # w2 row
        ],
        out_specs=pl.BlockSpec((1, B, 1), lambda c, j: (c, 0, 0)),
        scratch_shapes=[pltpu.VMEM((B, 1), jnp.float32)],
        compiler_params=pltpu.CompilerParams(
            # Outer axis splits the w1 stream across TCs (v7x); inner axis is a
            # carried reduction into the scratch accumulator.
            dimension_semantics=("parallel", "arbitrary"),
            vmem_limit_bytes=vmem_limit,
        ),
        cost_estimate=cost,
    )(h_bf, t_bf, w1_bf, w2_row)

    # Tiny epilogue: combine per-slot partials, add folded bias, sigmoid.
    return jax.nn.sigmoid(jnp.sum(partials, axis=0) + bias)


# ----------------------------------------------------------------------------
# Kernel 2: eval-mode folded path  y = sigmoid(x @ (w1 @ w2) + (b1 @ w2 + b2))
# ----------------------------------------------------------------------------
def fold_params(params):
    """Collapse fc1/fc2 (valid only while dropout is identity). Off the hot path."""
    w1, b1, w2, b2 = params
    hi = jax.lax.Precision.HIGHEST
    w_eff = jnp.reshape(jnp.dot(w1, w2, precision=hi), (1, -1)).astype(jnp.float32)
    b_eff = jnp.reshape(jnp.dot(b1, w2, precision=hi) + b2, (1, 1)).astype(jnp.float32)
    return w_eff, b_eff


def _reward_folded_kernel(h_ref, t_ref, wh_ref, wt_ref, b_ref, o_ref):
    # bf16 activations are promoted to f32 by the f32 weight rows; reduce in f32.
    y = jnp.sum(h_ref[...] * wh_ref[...], axis=-1, keepdims=True)
    y = y + jnp.sum(t_ref[...] * wt_ref[...], axis=-1, keepdims=True)
    o_ref[...] = jax.nn.sigmoid(y + b_ref[0, 0])


def reward_model_forward_folded(hidden_state, token_embedding, folded, *, block_b=None):
    """Fast eval-mode forward using precomputed (w_eff, b_eff); no HBM concat."""
    w_eff, b_eff = folded
    B, H = hidden_state.shape
    _, T = token_embedding.shape
    D = H + T
    assert w_eff.shape == (1, D), w_eff.shape

    # Split the folded weight row to match the two un-concatenated inputs.
    w_h = w_eff[:, :H]
    w_t = w_eff[:, H:]
    h_bf = hidden_state.astype(jnp.bfloat16)   # x traffic is this path's whole cost
    t_bf = token_embedding.astype(jnp.bfloat16)

    if block_b is None:
        block_b = B if B <= 1024 else 1024
    if B % block_b != 0:
        block_b = B
    grid = (B // block_b,)

    return pl.pallas_call(
        _reward_folded_kernel,
        out_shape=jax.ShapeDtypeStruct((B, 1), jnp.float32),
        grid=grid,
        in_specs=[
            pl.BlockSpec((block_b, H), lambda i: (i, 0)),
            pl.BlockSpec((block_b, T), lambda i: (i, 0)),
            pl.BlockSpec((1, H), lambda i: (0, 0)),
            pl.BlockSpec((1, T), lambda i: (0, 0)),
            pl.BlockSpec(memory_space=pltpu.MemorySpace.SMEM),
        ],
        out_specs=pl.BlockSpec((block_b, 1), lambda i: (i, 0)),
        compiler_params=pltpu.CompilerParams(
            dimension_semantics=("parallel",),
        ),
    )(h_bf, t_bf, w_h, w_t, b_eff)


# ----------------------------------------------------------------------------
# Params / references
# ----------------------------------------------------------------------------
def init_params(key, hidden_size, token_embedding_size):
    """Deterministic synthetic parameters matching nn.Linear shapes (stored (in, out))."""
    D = hidden_size + token_embedding_size
    k1, k2, k3, k4 = jax.random.split(key, 4)
    scale = 1.0 / jnp.sqrt(D)
    w1 = jax.random.uniform(k1, (D, D), jnp.float32, -scale, scale)
    b1 = jax.random.uniform(k2, (1, D), jnp.float32, -scale, scale)
    w2 = jax.random.uniform(k3, (D, 1), jnp.float32, -scale, scale)
    b2 = jax.random.uniform(k4, (1, 1), jnp.float32, -scale, scale)
    return w1, b1, w2, b2


def reference_forward(hidden_state, token_embedding, params):
    """Full-precision plain-JAX reference of the PyTorch module (eval mode)."""
    w1, b1, w2, b2 = params
    hi = jax.lax.Precision.HIGHEST
    x = jnp.concatenate([hidden_state, token_embedding], axis=-1)
    h = jnp.dot(x, w1, precision=hi) + b1
    y = jnp.dot(h, w2, precision=hi) + b2
    return jax.nn.sigmoid(y)


def reference_fused_numerics(hidden_state, token_embedding, params):
    """Reference mirroring the fused kernel's numerics (bf16 fc1, f32 fc2 reduce)."""
    w1, b1, w2, b2 = params
    x = jnp.concatenate([hidden_state, token_embedding], axis=-1)
    h = jnp.dot(x.astype(jnp.bfloat16), w1.astype(jnp.bfloat16),
                preferred_element_type=jnp.float32)
    w2_row = jnp.reshape(w2, (1, -1)).astype(jnp.float32)
    bias = jnp.sum(b1 * jnp.reshape(w2, (1, -1))) + jnp.reshape(b2, ())
    y = jnp.sum(h * w2_row, axis=-1, keepdims=True) + bias
    return jax.nn.sigmoid(y)


def reference_folded_numerics(hidden_state, token_embedding, folded):
    """Reference mirroring the folded kernel's numerics (bf16 x storage, f32 reduce)."""
    w_eff, b_eff = folded
    x = jnp.concatenate([hidden_state, token_embedding], axis=-1)
    x_bf = x.astype(jnp.bfloat16).astype(jnp.float32)
    y = jnp.sum(x_bf * w_eff, axis=-1, keepdims=True) + b_eff[0, 0]
    return jax.nn.sigmoid(y)


if __name__ == "__main__":
    # Small lane-aligned shapes: B=8, H=T=128 -> D=256.
    B, H, T = 8, 128, 128
    key = jax.random.PRNGKey(0)
    k_h, k_t, k_p = jax.random.split(key, 3)

    hidden_state = jax.random.normal(k_h, (B, H), jnp.float32)
    token_embedding = jax.random.normal(k_t, (B, T), jnp.float32)
    params = init_params(k_p, H, T)

    # Fused kernel, auto tile (block_n == D here -> single-step path).
    out_auto = jax.block_until_ready(
        reward_model_forward(hidden_state, token_embedding, params))
    # Fused kernel with an explicit 128-wide tile so the multi-step grid, the
    # parallel outer axis (2 partial slots), and the accumulator are exercised.
    out_tiled = jax.block_until_ready(
        reward_model_forward(hidden_state, token_embedding, params, block_n=128))

    # Folded eval-mode kernel (fc1/fc2 collapsed into one affine map).
    folded = fold_params(params)
    out_folded = jax.block_until_ready(
        reward_model_forward_folded(hidden_state, token_embedding, folded))

    ref_f32 = reference_forward(hidden_state, token_embedding, params)
    ref_fused = reference_fused_numerics(hidden_state, token_embedding, params)
    ref_fold = reference_folded_numerics(hidden_state, token_embedding, folded)

    assert out_auto.shape == (B, 1), out_auto.shape
    assert out_tiled.shape == (B, 1), out_tiled.shape
    assert out_folded.shape == (B, 1), out_folded.shape
    assert jnp.allclose(out_auto, ref_fused, atol=1e-4, rtol=1e-4), (out_auto, ref_fused)
    assert jnp.allclose(out_tiled, ref_fused, atol=1e-4, rtol=1e-4), (out_tiled, ref_fused)
    assert jnp.allclose(out_auto, ref_f32, atol=2e-2), (out_auto, ref_f32)
    assert jnp.allclose(out_tiled, ref_f32, atol=2e-2), (out_tiled, ref_f32)
    assert jnp.allclose(out_folded, ref_fold, atol=1e-4, rtol=1e-4), (out_folded, ref_fold)
    assert jnp.allclose(out_folded, ref_f32, atol=1e-2), (out_folded, ref_f32)

    print("KERNEL_OK")
</pallas_src>

<mosaic_0001>
module attributes {stable_mosaic.version = 11 : i64} {
  func.func @_reward_fused_kernel(%arg0: i32, %arg1: i32, %arg2: memref<8x128xbf16, #tpu.memory_space<vmem>>, %arg3: memref<8x128xbf16, #tpu.memory_space<vmem>>, %arg4: memref<256x256xbf16, #tpu.memory_space<vmem>>, %arg5: memref<1x256xf32, #tpu.memory_space<vmem>>, %arg6: memref<1x8x1xf32, #tpu.memory_space<vmem>>, %arg7: memref<8x1xf32, #tpu.memory_space<vmem>>) attributes {dimension_semantics = [#tpu.dimension_semantics<parallel>, #tpu.dimension_semantics<arbitrary>], iteration_bounds = array<i64: 1, 1>, scalar_prefetch = 0 : i64, scratch_operands = 1 : i64, tpu.core_type = #tpu.core_type<tc>, window_params = [{pipeline_mode = #tpu.pipeline_mode<synchronous>, transform_indices = @transform_0, window_bounds = array<i64: 8, 128>}, {pipeline_mode = #tpu.pipeline_mode<synchronous>, transform_indices = @transform_1, window_bounds = array<i64: 8, 128>}, {transform_indices = @transform_2, window_bounds = array<i64: 256, 256>}, {transform_indices = @transform_3, window_bounds = array<i64: 1, 256>}, {transform_indices = @transform_4, window_bounds = array<i64: 1, 8, 1>}]} {
    %c0_i32 = arith.constant 0 : i32
    %0 = arith.cmpi eq, %arg1, %c0_i32 : i32
    %1 = arith.extui %0 : i1 to i32
    %c0_i32_0 = arith.constant 0 : i32
    %2 = arith.cmpi ne, %1, %c0_i32_0 : i32
    scf.if %2 {
      %cst_17 = arith.constant 0.000000e+00 : f32
      %21 = vector.broadcast %cst_17 : f32 to vector<8x1xf32>
      %c0_18 = arith.constant 0 : index
      %c0_19 = arith.constant 0 : index
      %22 = vector.load %arg7[%c0_18, %c0_19] : memref<8x1xf32, #tpu.memory_space<vmem>>, vector<8x1xf32>
      tpu.vector_store %arg7[%c0_18, %c0_19], %21 {strides = array<i32>} : memref<8x1xf32, #tpu.memory_space<vmem>>, vector<8x1xf32>,
    } else {
    }
    %c0 = arith.constant 0 : index
    %c0_1 = arith.constant 0 : index
    %3 = vector.load %arg2[%c0, %c0_1] : memref<8x128xbf16, #tpu.memory_space<vmem>>, vector<8x128xbf16>
    %c0_2 = arith.constant 0 : index
    %c0_3 = arith.constant 0 : index
    %4 = vector.load %arg4[%c0_2, %c0_3] : memref<256x256xbf16, #tpu.memory_space<vmem>>, vector<128x256xbf16>
    %cst = arith.constant dense<0.000000e+00> : vector<8x256xf32>
    %5 = tpu.matmul %3, %4, %cst {dimension_numbers = #tpu.dot_dimension_numbers<[1], [0], [0], [1], [0, 0, 1, 1], [], []>} : vector<8x128xbf16>, vector<128x256xbf16>, vector<8x256xf32> -> vector<8x256xf32>
    %c0_4 = arith.constant 0 : index
    %c0_5 = arith.constant 0 : index
    %6 = vector.load %arg3[%c0_4, %c0_5] : memref<8x128xbf16, #tpu.memory_space<vmem>>, vector<8x128xbf16>
    %c128 = arith.constant 128 : index
    %c0_6 = arith.constant 0 : index
    %7 = vector.load %arg4[%c128, %c0_6] : memref<256x256xbf16, #tpu.memory_space<vmem>>, vector<128x256xbf16>
    %cst_7 = arith.constant dense<0.000000e+00> : vector<8x256xf32>
    %8 = tpu.matmul %6, %7, %cst_7 {dimension_numbers = #tpu.dot_dimension_numbers<[1], [0], [0], [1], [0, 0, 1, 1], [], []>} : vector<8x128xbf16>, vector<128x256xbf16>, vector<8x256xf32> -> vector<8x256xf32>
    %9 = arith.addf %5, %8 : vector<8x256xf32>
    %c0_8 = arith.constant 0 : index
    %c0_9 = arith.constant 0 : index
    %10 = vector.load %arg7[%c0_8, %c0_9] : memref<8x1xf32, #tpu.memory_space<vmem>>, vector<8x1xf32>
    %c0_10 = arith.constant 0 : index
    %c0_11 = arith.constant 0 : index
    %11 = vector.load %arg5[%c0_10, %c0_11] : memref<1x256xf32, #tpu.memory_space<vmem>>, vector<1x256xf32>
    %12 = vector.broadcast %11 : vector<1x256xf32> to vector<8x256xf32>
    %13 = arith.mulf %9, %12 : vector<8x256xf32>
    %cst_12 = arith.constant dense<0.000000e+00> : vector<8xf32>
    %14 = vector.multi_reduction <add>, %13, %cst_12 [1] : vector<8x256xf32> to vector<8xf32>
    %15 = vector.shape_cast %14 : vector<8xf32> to vector<8x1xf32>
    %16 = arith.addf %10, %15 : vector<8x1xf32>
    %c0_13 = arith.constant 0 : index
    %c0_14 = arith.constant 0 : index
    %17 = vector.load %arg7[%c0_13, %c0_14] : memref<8x1xf32, #tpu.memory_space<vmem>>, vector<8x1xf32>
    tpu.vector_store %arg7[%c0_13, %c0_14], %16 {strides = array<i32>} : memref<8x1xf32, #tpu.memory_space<vmem>>, vector<8x1xf32>,
    %c0_i32_15 = arith.constant 0 : i32
    %18 = arith.cmpi eq, %arg1, %c0_i32_15 : i32
    %19 = arith.extui %18 : i1 to i32
    %c0_i32_16 = arith.constant 0 : i32
    %20 = arith.cmpi ne, %19, %c0_i32_16 : i32
    scf.if %20 {
      %c0_17 = arith.constant 0 : index
      %c0_18 = arith.constant 0 : index
      %21 = vector.load %arg7[%c0_17, %c0_18] : memref<8x1xf32, #tpu.memory_space<vmem>>, vector<8x1xf32>
      %c0_19 = arith.constant 0 : index
      %c0_20 = arith.constant 0 : index
      %c0_21 = arith.constant 0 : index
      %22 = vector.load %arg6[%c0_19, %c0_20, %c0_21] : memref<1x8x1xf32, #tpu.memory_space<vmem>>, vector<1x8x1xf32>
      %23 = vector.shape_cast %22 : vector<1x8x1xf32> to vector<8x1xf32>
      %24 = vector.shape_cast %21 : vector<8x1xf32> to vector<1x8x1xf32>
      tpu.vector_store %arg6[%c0_19, %c0_20, %c0_21], %24 {strides = array<i32>} : memref<1x8x1xf32, #tpu.memory_space<vmem>>, vector<1x8x1xf32>,
    } else {
    }
    return
  }
  func.func @transform_0(%arg0: i32, %arg1: i32) -> (i32, i32) {
    %c0_i32 = arith.constant 0 : i32
    %c0_i32_0 = arith.constant 0 : i32
    %c0_i32_1 = arith.constant 0 : i32
    return %c0_i32, %c0_i32_0 : i32, i32
  }
  func.func @transform_1(%arg0: i32, %arg1: i32) -> (i32, i32) {
    %c0_i32 = arith.constant 0 : i32
    %c0_i32_0 = arith.constant 0 : i32
    %c0_i32_1 = arith.constant 0 : i32
    return %c0_i32, %c0_i32_0 : i32, i32
  }
  func.func @transform_2(%arg0: i32, %arg1: i32) -> (i32, i32) {
    %c1_i32 = arith.constant 1 : i32
    %0 = arith.muli %arg0, %c1_i32 : i32
    %1 = arith.addi %0, %arg1 : i32
    %c0_i32 = arith.constant 0 : i32
    %c0_i32_0 = arith.constant 0 : i32
    return %c0_i32, %1 : i32, i32
  }
  func.func @transform_3(%arg0: i32, %arg1: i32) -> (i32, i32) {
    %c1_i32 = arith.constant 1 : i32
    %0 = arith.muli %arg0, %c1_i32 : i32
    %1 = arith.addi %0, %arg1 : i32
    %c0_i32 = arith.constant 0 : i32
    %c0_i32_0 = arith.constant 0 : i32
    return %c0_i32, %1 : i32, i32
  }
  func.func @transform_4(%arg0: i32, %arg1: i32) -> (i32, i32, i32) {
    %c0_i32 = arith.constant 0 : i32
    %c0_i32_0 = arith.constant 0 : i32
    %c0_i32_1 = arith.constant 0 : i32
    return %arg0, %c0_i32, %c0_i32_0 : i32, i32, i32
  }
}

</mosaic_0001>

<llo_original>
// kernel: tpu_custom_call.1
$region0: #{tpu_custom_call.1}
  #allocation0 [shape = 'u32[]', space=smem, size = 0x4, offset = 0x4, fixed_abs, tag = 'smem constant byte address 0x4 - core index']
  #allocation1 [shape = 'u32[72,128]{1,0:T(1,128)}', space=vmem, size = 0x9000, scoped, tag = 'internal scratch']
  #allocation2 [shape = 'f32[8,1]{1,0:T(8,128)}', space=vmem, size = 0x1000, scoped, tag = 'scratch operand']
  %s0 = inlined_call_operand.hbm [shape: bf16[8,128], index: 0, kind: input, shape index: {}]
  %s1 = inlined_call_operand.hbm [shape: bf16[8,128], index: 1, kind: input, shape index: {}]
  %s2 = inlined_call_operand.hbm [shape: bf16[256,256], index: 2, kind: input, shape index: {}]
  %s3 = inlined_call_operand.vmem [shape: f32[1,256], index: 3, kind: input, shape index: {}]
  %s4 = inlined_call_operand.vmem [shape: f32[1,8,1], index: 4, kind: output, shape index: {}]
  %s5 = sld [smem:[#allocation0]]
  $region46: #{tpu_custom_call.1} parent=0
    _
  %s7 = ssub.s32 1, %s5
  %s8 = scalar_select 0, %s7, %s5
  $region1: #{tpu_custom_call.1} parent=0
    #allocation3 [shape = 'u8[2048]{0}', space=vmem, size = 0x800, scoped, tag = 'input window, operand 0, single buffered']
    #allocation4 [shape = 's32[1]{0}', space=sflag, size = 0x4, scoped, tag = 'scoped memory for tpu_custom_call.1']
    #allocation5 [shape = 'u8[2048]{0}', space=vmem, size = 0x800, scoped, tag = 'input window, operand 1, single buffered']
    #allocation6 [shape = 's32[1]{0}', space=sflag, size = 0x4, scoped, tag = 'scoped memory for tpu_custom_call.1']
    #allocation7 [shape = 'u8[131072]{0}', space=vmem, size = 0x20000, scoped, tag = 'input window, operand 2, single buffered']
    %9 = vsyncpa [#allocation4], 0
    %10 = vsyncpa [#allocation6], 0
    // Predicated region
    $region2: #{tpu_custom_call.1} parent=1 // pred_check
      _
    $region3: #{tpu_custom_call.1} parent=1 // pred_check_branch
      %12 = sbr.rel (0) target = $region5
    $region4: #{tpu_custom_call.1} parent=1 // pred_region
      %14 = vsyncadd [#allocation4], 0
      %s16 = sshll.u32 %s0, 4
      %s17 = int_to_ptr.hbm [resolvable:$true] %s16
      %s18 = sshll.u32 [#allocation3], 4
      %s19 = int_to_ptr.vmem [resolvable:$true] %s18
      %21 = dma.hbm_to_vmem [thread:$0]  %s17, 64, %s19, [#allocation4]
    $region5: #{tpu_custom_call.1} parent=1 // pred_fallthru
      _
    // Predicated region
    $region6: #{tpu_custom_call.1} parent=1 // pred_check
      _
    $region7: #{tpu_custom_call.1} parent=1 // pred_check_branch
      %23 = sbr.rel (0) target = $region9
    $region8: #{tpu_custom_call.1} parent=1 // pred_region
      %25 = vsyncadd [#allocation6], 0
      %s27 = sshll.u32 %s1, 4
      %s28 = int_to_ptr.hbm [resolvable:$true] %s27
      %s29 = sshll.u32 [#allocation5], 4
      %s30 = int_to_ptr.vmem [resolvable:$true] %s29
      %32 = dma.hbm_to_vmem [thread:$0]  %s28, 64, %s30, [#allocation6]
    $region9: #{tpu_custom_call.1} parent=1 // pred_fallthru
      _
    // Predicated region
    $region10: #{tpu_custom_call.1} parent=1 // pred_check
      _
    $region11: #{tpu_custom_call.1} parent=1 // pred_check_branch
      %34 = sbr.rel (0) target = $region13
    $region12: #{tpu_custom_call.1} parent=1 // pred_region
      %s35 = sadd.s32 0, 0
      %s36 = smul.u32 2, %s35
      %38 = vsyncadd [#allocation6], 0
      %s39 = smul.addr %s36, 4
      %s40 = scalar_lea.hbm %s2, %s39
      %s41 = sshll.u32 %s40, 4
      %s42 = int_to_ptr.hbm [resolvable:$true] %s41
      %s43 = sshll.u32 [#allocation7], 4
      %s44 = int_to_ptr.vmem [resolvable:$true] %s43
      %49 = dma.hbm_to_vmem [thread:$0]  %s42, 4096, %s44, [#allocation6], 128, 128, 8
    $region13: #{tpu_custom_call.1} parent=1 // pred_fallthru
      _
    // Predicated region
    $region14: #{tpu_custom_call.1} parent=1 // pred_check
      _
    $region15: #{tpu_custom_call.1} parent=1 // pred_check_branch
      %51 = sbr.rel (0) target = $region17
    $region16: #{tpu_custom_call.1} parent=1 // pred_region
      %s52 = sadd.s32 0, 0
      %s53 = smul.u32 2, %s52
      %p54 = scmp.lt.s32.totalorder %s53, 1
      %s55 = scalar_select %p54, %s53, 1
      %s56 = scalar_lea.vmem %s3, %s55
      %s57 = sadd.s32 0, 0
      %s58 = smul.u32 2, %s57
    $region17: #{tpu_custom_call.1} parent=1 // pred_fallthru
      _
    // Predicated region
    $region18: #{tpu_custom_call.1} parent=1 // pred_check
      _
    $region19: #{tpu_custom_call.1} parent=1 // pred_check_branch
      %60 = sbr.rel (0) target = $region21
    $region20: #{tpu_custom_call.1} parent=1 // pred_region
      %62 = dma.done [#allocation4], 64
    $region21: #{tpu_custom_call.1} parent=1 // pred_fallthru
      _
    // Predicated region
    $region22: #{tpu_custom_call.1} parent=1 // pred_check
      _
    $region23: #{tpu_custom_call.1} parent=1 // pred_check_branch
      %64 = sbr.rel (0) target = $region25
    $region24: #{tpu_custom_call.1} parent=1 // pred_region
      %66 = dma.done [#allocation6], 64
    $region25: #{tpu_custom_call.1} parent=1 // pred_fallthru
      _
    // Predicated region
    $region26: #{tpu_custom_call.1} parent=1 // pred_check
      _
    $region27: #{tpu_custom_call.1} parent=1 // pred_check_branch
      %68 = sbr.rel (0) target = $region29
    $region28: #{tpu_custom_call.1} parent=1 // pred_region
      %70 = dma.done [#allocation6], 4096
    $region29: #{tpu_custom_call.1} parent=1 // pred_fallthru
      _
    %s71 = sadd.s32 0, 0
    %s72 = smul.u32 2, %s71
    %p73 = scmp.lt.s32.totalorder %s72, 1
    %s74 = scalar_select %p73, %s72, 1
    %s75 = scalar_lea.vmem %s3, %s74
    %s76 = sadd.s32 0, 0
    %s77 = smul.u32 2, %s76
    %s78 = sadd.s32 0, 0
    %s79 = smul.u32 2, %s78
    %p80 = scmp.lt.s32.totalorder %s79, 1
    %s81 = scalar_select %p80, %s79, 1
    %s82 = scalar_lea.vmem %s3, %s81
    %s83 = sadd.s32 0, 0
    %s84 = smul.u32 2, %s83
    %p85 = scmp.eq.s32.totalorder 0, 0
    // Predicated region
    $region30: #{tpu_custom_call.1} parent=1 // pred_check
      %p86 = pneg %p85
    $region31: #{tpu_custom_call.1} parent=1 // pred_check_branch
      %88 = sbr.rel (%p86) target = $region33
    $region32: #{tpu_custom_call.1} parent=1 // pred_region
      %vm89 = vcmask 7168
      %90 = vst.msk [vmem:[#allocation2] sm:$0xff] %vm89, 0.0
    $region33: #{tpu_custom_call.1} parent=1 // pred_fallthru
      _
    %v91 = vld [vmem:[#allocation3] sm:$0xf]
    %v92 = vld [vmem:[#allocation7] sm:$0xff]
    %v93 = vld [vmem:[#allocation7 + $0x8] sm:$0xff]
    %v94 = vld [vmem:[#allocation7 + $0x10] sm:$0xff]
    %v95 = vld [vmem:[#allocation7 + $0x18] sm:$0xff]
    %v96 = vld [vmem:[#allocation7 + $0x20] sm:$0xff]
    %v97 = vld [vmem:[#allocation7 + $0x28] sm:$0xff]
    %v98 = vld [vmem:[#allocation7 + $0x30] sm:$0xff]
    %v99 = vld [vmem:[#allocation7 + $0x38] sm:$0xff]
    %v100 = vld [vmem:[#allocation7 + $0x40] sm:$0xff]
    %v101 = vld [vmem:[#allocation7 + $0x48] sm:$0xff]
    %v102 = vld [vmem:[#allocation7 + $0x50] sm:$0xff]
    %v103 = vld [vmem:[#allocation7 + $0x58] sm:$0xff]
    %v104 = vld [vmem:[#allocation7 + $0x60] sm:$0xff]
    %v105 = vld [vmem:[#allocation7 + $0x68] sm:$0xff]
    %v106 = vld [vmem:[#allocation7 + $0x70] sm:$0xff]
    %v107 = vld [vmem:[#allocation7 + $0x78] sm:$0xff]
    %v108 = vld [vmem:[#allocation5] sm:$0xf]
    %v109 = vld [vmem:[#allocation7 + $0x80] sm:$0xff]
    %v110 = vld [vmem:[#allocation7 + $0x88] sm:$0xff]
    %v111 = vld [vmem:[#allocation7 + $0x90] sm:$0xff]
    %v112 = vld [vmem:[#allocation7 + $0x98] sm:$0xff]
    %v113 = vld [vmem:[#allocation7 + $0xa0] sm:$0xff]
    %v114 = vld [vmem:[#allocation7 + $0xa8] sm:$0xff]
    %v115 = vld [vmem:[#allocation7 + $0xb0] sm:$0xff]
    %v116 = vld [vmem:[#allocation7 + $0xb8] sm:$0xff]
    %v117 = vld [vmem:[#allocation7 + $0xc0] sm:$0xff]
    %v118 = vld [vmem:[#allocation7 + $0xc8] sm:$0xff]
    %v119 = vld [vmem:[#allocation7 + $0xd0] sm:$0xff]
    %v120 = vld [vmem:[#allocation7 + $0xd8] sm:$0xff]
    %v121 = vld [vmem:[#allocation7 + $0xe0] sm:$0xff]
    %v122 = vld [vmem:[#allocation7 + $0xe8] sm:$0xff]
    %v123 = vld [vmem:[#allocation7 + $0xf0] sm:$0xff]
    %v124 = vld [vmem:[#allocation7 + $0xf8] sm:$0xff]
    %v141 = vunpack.c.l.b16 %v109
    %v142 = vunpack.c.h.b16 %v109
    %v143 = vunpack.c.l.b16 %v110
    %v144 = vunpack.c.h.b16 %v110
    %v145 = vunpack.c.l.b16 %v111
    %v146 = vunpack.c.h.b16 %v111
    %v147 = vunpack.c.l.b16 %v112
    %v148 = vunpack.c.h.b16 %v112
    %v149 = vunpack.c.l.b16 %v113
    %v150 = vunpack.c.h.b16 %v113
    %v151 = vunpack.c.l.b16 %v114
    %v152 = vunpack.c.h.b16 %v114
    %v153 = vunpack.c.l.b16 %v115
    %v154 = vunpack.c.h.b16 %v115
    %v155 = vunpack.c.l.b16 %v116
    %v156 = vunpack.c.h.b16 %v116
    %v157 = vunpack.c.l.b16 %v117
    %v158 = vunpack.c.h.b16 %v117
    %v159 = vunpack.c.l.b16 %v118
    %v160 = vunpack.c.h.b16 %v118
    %v161 = vunpack.c.l.b16 %v119
    %v162 = vunpack.c.h.b16 %v119
    %v163 = vunpack.c.l.b16 %v120
    %v164 = vunpack.c.h.b16 %v120
    %v165 = vunpack.c.l.b16 %v121
    %v166 = vunpack.c.h.b16 %v121
    %v167 = vunpack.c.l.b16 %v122
    %v168 = vunpack.c.h.b16 %v122
    %v169 = vunpack.c.l.b16 %v123
    %v170 = vunpack.c.h.b16 %v123
    %v171 = vunpack.c.l.b16 %v124
    %v172 = vunpack.c.h.b16 %v124
    %v173 = vpack.c.b16 %v143, %v141
    %v174 = vpack.c.b16 %v144, %v142
    %v175 = vpack.c.b16 %v147, %v145
    %v176 = vpack.c.b16 %v148, %v146
    %v177 = vpack.c.b16 %v151, %v149
    %v178 = vpack.c.b16 %v152, %v150
    %v179 = vpack.c.b16 %v155, %v153
    %v180 = vpack.c.b16 %v156, %v154
    %v181 = vpack.c.b16 %v159, %v157
    %v182 = vpack.c.b16 %v160, %v158
    %v183 = vpack.c.b16 %v163, %v161
    %v184 = vpack.c.b16 %v164, %v162
    %v185 = vpack.c.b16 %v167, %v165
    %v186 = vpack.c.b16 %v168, %v166
    %v187 = vpack.c.b16 %v171, %v169
    %v188 = vpack.c.b16 %v172, %v170
    %205 = vmatpush.bf16.msra.mxu0 %v187
    %206 = vmatpush.bf16.msra.mxu0 %v185
    %207 = vmatpush.bf16.msra.mxu0 %v183
    %208 = vmatpush.bf16.msra.mxu0 %v181
    %209 = vmatpush.bf16.msra.mxu0 %v179
    %210 = vmatpush.bf16.msra.mxu0 %v177
    %211 = vmatpush.bf16.msra.mxu0 %v175
    %212 = vmatpush.bf16.msra.mxu0 %v173
    %213 = vmatmul.bf16.gmra.mxu0 %v108
    %v214 = vpop.f32.mrf.mxu0
    %v215 = vadd.f32 0.0, %v214
    %v216 = vpop.f32.mrf.mxu0
    %217 = vdwg.mxu0
    %218 = vmatpush.bf16.msra.mxu0 %v188
    %219 = vmatpush.bf16.msra.mxu0 %v186
    %220 = vmatpush.bf16.msra.mxu0 %v184
    %221 = vmatpush.bf16.msra.mxu0 %v182
    %222 = vmatpush.bf16.msra.mxu0 %v180
    %223 = vmatpush.bf16.msra.mxu0 %v178
    %224 = vmatpush.bf16.msra.mxu0 %v176
    %225 = vmatpush.bf16.msra.mxu0 %v174
    %226 = vmatmul.bf16.gmra.mxu0 %v108
    %v227 = vpop.f32.mrf.mxu0
    %v228 = vadd.f32 0.0, %v227
    %v229 = vpop.f32.mrf.mxu0
    %230 = vdwg.mxu0
    %v247 = vunpack.c.l.b16 %v92
    %v248 = vunpack.c.h.b16 %v92
    %v249 = vunpack.c.l.b16 %v93
    %v250 = vunpack.c.h.b16 %v93
    %v251 = vunpack.c.l.b16 %v94
    %v252 = vunpack.c.h.b16 %v94
    %v253 = vunpack.c.l.b16 %v95
    %v254 = vunpack.c.h.b16 %v95
    %v255 = vunpack.c.l.b16 %v96
    %v256 = vunpack.c.h.b16 %v96
    %v257 = vunpack.c.l.b16 %v97
    %v258 = vunpack.c.h.b16 %v97
    %v259 = vunpack.c.l.b16 %v98
    %v260 = vunpack.c.h.b16 %v98
    %v261 = vunpack.c.l.b16 %v99
    %v262 = vunpack.c.h.b16 %v99
    %v263 = vunpack.c.l.b16 %v100
    %v264 = vunpack.c.h.b16 %v100
    %v265 = vunpack.c.l.b16 %v101
    %v266 = vunpack.c.h.b16 %v101
    %v267 = vunpack.c.l.b16 %v102
    %v268 = vunpack.c.h.b16 %v102
    %v269 = vunpack.c.l.b16 %v103
    %v270 = vunpack.c.h.b16 %v103
    %v271 = vunpack.c.l.b16 %v104
    %v272 = vunpack.c.h.b16 %v104
    %v273 = vunpack.c.l.b16 %v105
    %v274 = vunpack.c.h.b16 %v105
    %v275 = vunpack.c.l.b16 %v106
    %v276 = vunpack.c.h.b16 %v106
    %v277 = vunpack.c.l.b16 %v107
    %v278 = vunpack.c.h.b16 %v107
    %v279 = vpack.c.b16 %v249, %v247
    %v280 = vpack.c.b16 %v250, %v248
    %v281 = vpack.c.b16 %v253, %v251
    %v282 = vpack.c.b16 %v254, %v252
    %v283 = vpack.c.b16 %v257, %v255
    %v284 = vpack.c.b16 %v258, %v256
    %v285 = vpack.c.b16 %v261, %v259
    %v286 = vpack.c.b16 %v262, %v260
    %v287 = vpack.c.b16 %v265, %v263
    %v288 = vpack.c.b16 %v266, %v264
    %v289 = vpack.c.b16 %v269, %v267
    %v290 = vpack.c.b16 %v270, %v268
    %v291 = vpack.c.b16 %v273, %v271
    %v292 = vpack.c.b16 %v274, %v272
    %v293 = vpack.c.b16 %v277, %v275
    %v294 = vpack.c.b16 %v278, %v276
    %311 = vmatpush.bf16.msra.mxu0 %v293
    %312 = vmatpush.bf16.msra.mxu0 %v291
    %313 = vmatpush.bf16.msra.mxu0 %v289
    %314 = vmatpush.bf16.msra.mxu0 %v287
    %315 = vmatpush.bf16.msra.mxu0 %v285
    %316 = vmatpush.bf16.msra.mxu0 %v283
    %317 = vmatpush.bf16.msra.mxu0 %v281
    %318 = vmatpush.bf16.msra.mxu0 %v279
    %319 = vmatmul.bf16.gmra.mxu0 %v91
    %v320 = vpop.f32.mrf.mxu0
    %v321 = vadd.f32 %v215, %v320
    %v322 = vpop.f32.mrf.mxu0
    %323 = vdwg.mxu0
    %324 = vmatpush.bf16.msra.mxu0 %v294
    %325 = vmatpush.bf16.msra.mxu0 %v292
    %326 = vmatpush.bf16.msra.mxu0 %v290
    %327 = vmatpush.bf16.msra.mxu0 %v288
    %328 = vmatpush.bf16.msra.mxu0 %v286
    %329 = vmatpush.bf16.msra.mxu0 %v284
    %330 = vmatpush.bf16.msra.mxu0 %v282
    %331 = vmatpush.bf16.msra.mxu0 %v280
    %332 = vmatmul.bf16.gmra.mxu0 %v91
    %v333 = vpop.f32.mrf.mxu0
    %v334 = vadd.f32 %v228, %v333
    %v335 = vpop.f32.mrf.mxu0
    %336 = vdwg.mxu0
    %v337 = vld [vmem:[#allocation2] sm:$0xff]
    %v338 = vld [vmem:[%s82] sm:$0x3]
    %v340 = vperm.slane %v338, 0
    %v341 = vperm.slane %v338, 1
    %v344 = vmul.f32 %v321, %v340
    %v345 = vmul.f32 %v334, %v341
    %v346 = vadd.f32 %v344, %v345
    %347 = vadd.xlane.f32.xlu0 %v346
    %v348 = vpop.xlane.xlu0 %347
    %v349 = vadd.f32 %v337, %v348
    %vm350 = vcmask 7168
    %351 = vst.msk [vmem:[#allocation2] sm:$0xff] %vm350, %v349
    // Predicated region
    $region34: #{tpu_custom_call.1} parent=1 // pred_check
      %p352 = pneg %p85
    $region35: #{tpu_custom_call.1} parent=1 // pred_check_branch
      %354 = sbr.rel (%p352) target = $region37
    $region36: #{tpu_custom_call.1} parent=1 // pred_region
      %v355 = vld [vmem:[#allocation2] sm:$0xff]
      %356 = vst.msk [vmem:[%s4] sm:$0xff] %vm350, %v355
    $region37: #{tpu_custom_call.1} parent=1 // pred_fallthru
      _
    // Predicated region
    $region38: #{tpu_custom_call.1} parent=1 // pred_check
      _
    $region39: #{tpu_custom_call.1} parent=1 // pred_check_branch
      %358 = sbr.rel (0) target = $region41
    $region40: #{tpu_custom_call.1} parent=1 // pred_region
      _
    $region41: #{tpu_custom_call.1} parent=1 // pred_fallthru
      _
    // Predicated region
    $region42: #{tpu_custom_call.1} parent=1 // pred_check
      _
    $region43: #{tpu_custom_call.1} parent=1 // pred_check_branch
      %360 = sbr.rel (0) target = $region45
    $region44: #{tpu_custom_call.1} parent=1 // pred_region
      _
    $region45: #{tpu_custom_call.1} parent=1 // pred_fallthru
      _
    %361 = vsyncpa [#allocation4], 1
    %362 = vsyncpa [#allocation6], 1

</llo_original>
